<compile_context>
chip_gen: v7x
topology: tpu7x:2x2x1
jax: 0.10.0
libtpu: 0.0.40
codegen_flags: <defaults>
</compile_context>

<pallas_src>
import functools

import jax
import jax.numpy as jnp
import numpy as np
from jax.experimental import pallas as pl
from jax.experimental.pallas import tpu as pltpu

_LANES = 384  # 3 channels * 128 lanes: lane-dense and pixel-triple aligned.


# ----------------------------------------------------------------------------
# Kernel
# ----------------------------------------------------------------------------
def _jit_wrapper_kernel(coef_ref, img_ref, mask_ref, out_ref):
    # coef_ref : VMEM (8, L)  lane-periodic coefficient rows (resident, loaded once)
    #            rows 0..4: shift-slot coefficients, row 5: w[3, c], row 6: b[c]
    # img_ref  : VMEM (TR, L) image, channel-interleaved NHWC flat view
    # mask_ref : VMEM (TR, L) mask broadcast to 3 channels (same lane layout)
    # out_ref  : VMEM (TR, L) output, same interleaved layout (free reshape to NHWC)
    coef = coef_ref[...]
    m = mask_ref[...]
    img = img_ref[...]
    L = img.shape[-1]

    # masked_img = image * (1 - mask), channel-interleaved (pure VPU).
    mi = img * (1.0 - m)

    # 1x1 conv over (masked_img, mask): per-lane FMAs against lane-periodic
    # coefficients plus 4 lane rolls (XLU) to reach the 2 sibling channels of
    # each pixel.  Cross-row wraps of the rolls are multiplied by zero
    # coefficients, so they never contaminate the result.
    conv = coef[5:6] * m + coef[6:7]                         # w[3,c]*mask + b[c]
    conv = conv + coef[2:3] * mi                             # same-channel term
    conv = conv + coef[1:2] * pltpu.roll(mi, shift=1, axis=1)
    conv = conv + coef[0:1] * pltpu.roll(mi, shift=2, axis=1)
    conv = conv + coef[3:4] * pltpu.roll(mi, shift=L - 1, axis=1)
    conv = conv + coef[4:5] * pltpu.roll(mi, shift=L - 2, axis=1)

    # Blend: mask * model_out + masked_img.
    out_ref[...] = (m * conv + mi).astype(out_ref.dtype)


# ----------------------------------------------------------------------------
# Helpers
# ----------------------------------------------------------------------------
@functools.lru_cache(maxsize=None)
def _roll_shifts_right():
    """Pin pltpu.roll's direction convention at runtime (defensive: makes the
    coefficient-row ordering correct under either convention)."""
    x = jnp.tile(jnp.arange(128, dtype=jnp.float32)[None, :], (8, 1))

    def probe(x_ref, o_ref):
        o_ref[...] = pltpu.roll(x_ref[...], shift=1, axis=1)

    y = pl.pallas_call(
        probe, out_shape=jax.ShapeDtypeStruct((8, 128), jnp.float32))(x)
    # numpy convention: result[i] = x[i - 1]  ->  y[0, 0] == 127.
    return bool(np.asarray(y)[0, 0] == 127.0)


def _pick_row_tile(r0):
    """Row-tile so that (a) >= 4 grid steps whenever possible (v7x: 2 TCs x
    >= 2 steps each for pipelining), (b) each block <= 768 KiB/operand so the
    double-buffered working set (3 streamed operands ~ 4.5 MiB) fits every
    generation's default scoped VMEM (16 MiB v5e, 32 MiB v6e/v7x)."""
    if r0 < 32:
        return r0  # single full-extent block (allowed by the BlockSpec rule)
    tr = min(512, (r0 // 4) // 8 * 8)
    return max(tr, 8)


def _build_coef(w, b, L, rolls_shift_right):
    """Lane-periodic coefficient rows for the interleaved 1x1 conv.

    Row ordering matches the fixed roll-shift slots used in the kernel
    (shift 2, shift 1, no shift, shift L-1, shift L-2), adapted to the roll
    direction convention.  Row 5 = w[3, c] (mask input channel), row 6 = b[c].
    """
    w32 = jnp.asarray(w, jnp.float32)
    b32 = jnp.asarray(b, jnp.float32)
    c = jnp.arange(L, dtype=jnp.int32) % 3  # output channel of each lane
    a = {}
    for d in range(-2, 3):
        k = c + d                                   # source (input) channel
        valid = (k >= 0) & (k <= 2)
        a[d] = jnp.where(valid, w32[jnp.clip(k, 0, 3), c], 0.0)
    # Slot t multiplies roll(mi, shift=t); with numpy convention that is
    # mi[l - t] == source-channel offset d = -t.
    order = (-2, -1, 0, 1, 2) if rolls_shift_right else (2, 1, 0, -1, -2)
    rows = [a[d] for d in order]
    rows.append(w32[3, c])                          # w[3, c]  (mask channel)
    rows.append(b32[c])                             # bias
    rows.append(jnp.zeros((L,), jnp.float32))       # pad to 8 sublanes
    return jnp.stack(rows, axis=0)                  # (8, L)


# ----------------------------------------------------------------------------
# Forward
# ----------------------------------------------------------------------------
@functools.partial(jax.jit, static_argnums=(4,))
def _forward_jit(image, mask, w, b, rolls_shift_right):
    n, h, wd, ci = image.shape
    p = n * h * wd
    total = 3 * p
    L = _LANES

    r0 = pl.cdiv(total, L)
    tr = _pick_row_tile(r0)
    steps = pl.cdiv(r0, tr)
    r_pad = steps * tr
    total_pad = r_pad * L

    # Free reshapes of NHWC (channel is already the fastest axis) -- no
    # transpose, no planar temp.  The mask broadcast is the only extra pass.
    img_flat = image.astype(jnp.float32).reshape(total)
    mask_flat = jnp.broadcast_to(
        mask.astype(jnp.float32), (n, h, wd, 3)).reshape(total)
    if total_pad != total:
        pad = total_pad - total
        img_flat = jnp.pad(img_flat, (0, pad))
        mask_flat = jnp.pad(mask_flat, (0, pad))
    img2d = img_flat.reshape(r_pad, L)
    mask2d = mask_flat.reshape(r_pad, L)

    coef = _build_coef(w, b, L, rolls_shift_right)

    out2d = pl.pallas_call(
        _jit_wrapper_kernel,
        out_shape=jax.ShapeDtypeStruct((r_pad, L), jnp.float32),
        grid=(steps,),
        in_specs=[
            pl.BlockSpec((8, L), lambda i: (0, 0)),       # coef (resident)
            pl.BlockSpec((tr, L), lambda i: (i, 0)),      # image (interleaved)
            pl.BlockSpec((tr, L), lambda i: (i, 0)),      # broadcast mask
        ],
        out_specs=pl.BlockSpec((tr, L), lambda i: (i, 0)),
        # Donate the broadcast-mask temp (same shape/dtype) to the output.
        input_output_aliases={2: 0},
        compiler_params=pltpu.CompilerParams(
            dimension_semantics=("parallel",),
        ),
        cost_estimate=pl.CostEstimate(
            flops=16 * total_pad,
            transcendentals=0,
            bytes_accessed=12 * total_pad + 32 * L,
        ),
    )(coef, img2d, mask2d)

    out_flat = out2d.reshape(total_pad)
    if total_pad != total:
        out_flat = out_flat[:total]
    return out_flat.reshape(n, h, wd, 3)


def jit_wrapper_forward(image, mask, w, b):
    """image: (N,H,W,3) f32, mask: (N,H,W,1) f32, w: (4,3) f32, b: (3,) f32.

    Returns (N,H,W,3) f32, identical to JITWrapper.forward with `model` = 1x1 conv.
    """
    n, h, wd, ci = image.shape
    assert ci == 3 and mask.shape == (n, h, wd, 1)
    return _forward_jit(image, mask, w, b, _roll_shifts_right())


def _reference(image, mask, w, b):
    masked_img = image * (1.0 - mask)                         # NHWC
    input_t = jnp.concatenate([masked_img, mask], axis=-1)    # (N,H,W,4)
    model_out = jnp.einsum("nhwc,cd->nhwd", input_t, w) + b   # 1x1 conv, NHWC
    return mask * model_out + masked_img


if __name__ == "__main__":
    key = jax.random.PRNGKey(0)
    k_img, k_mask, k_w, k_b = jax.random.split(key, 4)

    # Deterministic synthetic "model" parameters: 1x1 conv, 4 -> 3 channels.
    w = jax.random.normal(k_w, (4, 3), dtype=jnp.float32) * 0.1
    b = jax.random.normal(k_b, (3,), dtype=jnp.float32) * 0.01

    # Small shapes consistent with the module (original is 1x512x512x3).
    # (1,16,16): single-block path; (1,64,512): 4-step grid path.
    for (N, H, W) in [(1, 16, 16), (1, 64, 512)]:
        image = jax.random.uniform(k_img, (N, H, W, 3), dtype=jnp.float32)
        mask = jax.random.uniform(k_mask, (N, H, W, 1), dtype=jnp.float32)

        out = jax.block_until_ready(jit_wrapper_forward(image, mask, w, b))
        ref = jax.block_until_ready(_reference(image, mask, w, b))

        assert out.shape == (N, H, W, 3)
        np.testing.assert_allclose(np.asarray(out), np.asarray(ref),
                                   rtol=1e-5, atol=1e-5)

    print("KERNEL_OK")
</pallas_src>

<mosaic_0001>
module attributes {stable_mosaic.version = 11 : i64} {
  func.func @probe(%arg0: memref<8x128xf32, #tpu.memory_space<vmem>>, %arg1: memref<8x128xf32, #tpu.memory_space<vmem>>) attributes {dimension_semantics = [], scalar_prefetch = 0 : i64, scratch_operands = 0 : i64, tpu.core_type = #tpu.core_type<tc>} {
    %c0 = arith.constant 0 : index
    %c0_0 = arith.constant 0 : index
    %0 = vector.load %arg0[%c0, %c0_0] : memref<8x128xf32, #tpu.memory_space<vmem>>, vector<8x128xf32>
    %c1_i32 = arith.constant 1 : i32
    %1 = tpu.dynamic_rotate %0 by %c1_i32 dim 1 : vector<8x128xf32>, i32 -> vector<8x128xf32>
    %c0_1 = arith.constant 0 : index
    %c0_2 = arith.constant 0 : index
    %2 = vector.load %arg1[%c0_1, %c0_2] : memref<8x128xf32, #tpu.memory_space<vmem>>, vector<8x128xf32>
    tpu.vector_store %arg1[%c0_1, %c0_2], %1 {strides = array<i32>} : memref<8x128xf32, #tpu.memory_space<vmem>>, vector<8x128xf32>,
    return
  }
}

</mosaic_0001>

<llo_original>
// kernel: tpu_custom_call.1
$region0: #{tpu_custom_call.1}
  #allocation0 [shape = 'u32[]', space=smem, size = 0x4, offset = 0x4, fixed_abs, tag = 'smem constant byte address 0x4 - core index']
  #allocation1 [shape = 'u32[144,128]{1,0:T(1,128)}', space=vmem, size = 0x12000, scoped, tag = 'internal scratch']
  %s0 = inlined_call_operand.hbm [shape: f32[8,128], index: 0, kind: input, shape index: {}]
  %s1 = inlined_call_operand.hbm [shape: f32[8,128], index: 1, kind: output, shape index: {}]
  %s2 = sld [smem:[#allocation0]]
  $region18: #{tpu_custom_call.1} parent=0
    _
  %s4 = ssub.s32 1, %s2
  %s5 = scalar_select 0, %s4, %s2
  $region1: #{tpu_custom_call.1} parent=0
    #allocation2 [shape = 'u8[4096]{0}', space=vmem, size = 0x1000, scoped, tag = 'input window, operand 0, single buffered']
    #allocation3 [shape = 's32[1]{0}', space=sflag, size = 0x4, scoped, tag = 'scoped memory for tpu_custom_call.1']
    #allocation4 [shape = 's32[1]{0}', space=sflag, size = 0x4, scoped, tag = 'scoped memory for tpu_custom_call.1']
    #allocation5 [shape = 'u8[4096]{0}', space=vmem, size = 0x1000, scoped, tag = 'output window, operand 0, single buffered']
    %6 = vsyncpa [#allocation3], 0
    %7 = vsyncpa [#allocation4], 0
    // Predicated region
    $region2: #{tpu_custom_call.1} parent=1 // pred_check
      _
    $region3: #{tpu_custom_call.1} parent=1 // pred_check_branch
      %9 = sbr.rel (0) target = $region5
    $region4: #{tpu_custom_call.1} parent=1 // pred_region
      %s11 = ssub.s32 128, 128
      %12 = vsyncadd [#allocation3], %s11
      %s14 = sshll.u32 [#allocation2], 4
      %s15 = int_to_ptr.vmem [resolvable:$true] %s14
      %17 = dma.hbm_to_vmem [thread:$0]  %s0, 128, %s15, [#allocation3]
    $region5: #{tpu_custom_call.1} parent=1 // pred_fallthru
      _
    // Predicated region
    $region6: #{tpu_custom_call.1} parent=1 // pred_check
      _
    $region7: #{tpu_custom_call.1} parent=1 // pred_check_branch
      %19 = sbr.rel (0) target = $region9
    $region8: #{tpu_custom_call.1} parent=1 // pred_region
      %20 = dma.done [#allocation3], 128
    $region9: #{tpu_custom_call.1} parent=1 // pred_fallthru
      _
    %v21 = vld [vmem:[#allocation2] sm:$0xff]
    %22 = vrot.lane.b32.xlu0 %v21, 1
    %v23 = vpop.permute.xlu0 %22
    %24 = vst [vmem:[#allocation5] sm:$0xff] %v23
    // Predicated region
    $region10: #{tpu_custom_call.1} parent=1 // pred_check
      _
    $region11: #{tpu_custom_call.1} parent=1 // pred_check_branch
      %26 = sbr.rel (0) target = $region13
    $region12: #{tpu_custom_call.1} parent=1 // pred_region
      %s28 = ssub.s32 128, 128
      %29 = vsyncadd [#allocation4], %s28
      %s31 = sshll.u32 [#allocation5], 4
      %s32 = int_to_ptr.vmem [resolvable:$true] %s31
      %34 = dma.vmem_to_hbm [thread:$0]  %s32, 128, %s1, [#allocation4]
    $region13: #{tpu_custom_call.1} parent=1 // pred_fallthru
      _
    // Predicated region
    $region14: #{tpu_custom_call.1} parent=1 // pred_check
      _
    $region15: #{tpu_custom_call.1} parent=1 // pred_check_branch
      %36 = sbr.rel (0) target = $region17
    $region16: #{tpu_custom_call.1} parent=1 // pred_region
      %37 = dma.done [#allocation4], 128
    $region17: #{tpu_custom_call.1} parent=1 // pred_fallthru
      _
    %38 = vsyncpa [#allocation3], 1
    %39 = vsyncpa [#allocation4], 1

</llo_original>
